<compile_context>
chip_gen: v6e
topology: v6e:2x2x1
jax: 0.10.0
libtpu: 0.0.40
codegen_flags: <defaults>
</compile_context>

<pallas_src>
from typing import NamedTuple, Optional

import jax
import jax.numpy as jnp
from jax.experimental import pallas as pl
from jax.experimental.pallas import tpu as pltpu


def _round_up(x, m):
    return (x + m - 1) // m * m


def _vmem_capacity_bytes():
    """Physical per-core VMEM (v5e/v6e: 128 MiB, v7x: 64 MiB). Conservative fallback."""
    try:
        cap = getattr(pltpu.get_tpu_info(), "vmem_capacity_bytes", None)
        if cap:
            return int(cap)
    except Exception:
        pass
    return 64 << 20


def _vmem_budget_bytes():
    # Leave headroom for Mosaic internal scratch / semaphores.
    return _vmem_capacity_bytes() - (8 << 20)


class TimeEmbedding2DParams(NamedTuple):
    """Padded, bf16-cast parameters. Prepare once at init, reuse every call."""
    w1: jax.Array   # (in_pad, e_pad) bf16
    b1: jax.Array   # (1, e_pad)     f32
    w2: jax.Array   # (e_pad, e_pad) bf16
    b2: jax.Array   # (1, e_pad)     f32
    in_dim: int
    e_dim: int
    in_pad: int
    e_pad: int
    tn: int         # output-column tile of the second matmul


def prepare_time_embedding_params(w1, b1, w2, b2, *, max_n_tile=2048):
    """Pad + cast the Linear weights once (hoisted out of the per-call path).

    w1: (2*t_dim, e_dim), b1: (e_dim,), w2: (e_dim, e_dim), b2: (e_dim,)
    (weights stored transposed w.r.t. torch.nn.Linear, i.e. (in, out)).
    """
    in_dim, e_dim = w1.shape
    assert w2.shape == (e_dim, e_dim), w2.shape

    budget = _vmem_budget_bytes()
    e_cols = _round_up(e_dim, 128)

    # Column tile of w2 / output: lane-dense (multiple of 128), small enough
    # that the double-buffered (e_pad, tn) bf16 w2 tile stays well within VMEM.
    tn = _round_up(min(max_n_tile, e_cols), 128)
    while tn > 128 and 2 * e_cols * tn * 2 > budget // 3:
        tn = max(128, _round_up(tn // 2, 128))

    in_pad = _round_up(in_dim, 16)     # bf16 sublane pack on K of matmul 1
    e_pad = _round_up(e_dim, tn)       # lane-dense and divisible by the N tile

    w1_p = jnp.pad(w1, ((0, in_pad - in_dim), (0, e_pad - e_dim))).astype(jnp.bfloat16)
    w2_p = jnp.pad(w2, ((0, e_pad - e_dim), (0, e_pad - e_dim))).astype(jnp.bfloat16)
    b1_p = jnp.pad(b1, (0, e_pad - e_dim)).reshape(1, e_pad).astype(jnp.float32)
    b2_p = jnp.pad(b2, (0, e_pad - e_dim)).reshape(1, e_pad).astype(jnp.float32)
    return TimeEmbedding2DParams(w1_p, b1_p, w2_p, b2_p,
                                 in_dim, e_dim, in_pad, e_pad, tn)


def _time_embedding_kernel(x_ref, w1_ref, b1_ref, w2_ref, b2_ref, o_ref, h_ref):
    # Grid: (batch tiles, output-column tiles of the 2nd matmul).
    @pl.when(pl.program_id(1) == 0)
    def _():
        # First Linear + SiLU: computed once per batch tile, cached in VMEM.
        h = jnp.dot(x_ref[...], w1_ref[...], preferred_element_type=jnp.float32)
        h = h + b1_ref[...]                 # bias add in f32
        h = h * jax.nn.sigmoid(h)           # SiLU in f32 (sigmoid on the EUP)
        h_ref[...] = h.astype(h_ref.dtype)  # bf16 for the 2nd MXU matmul

    # Second Linear on the current output-column tile.
    o = jnp.dot(h_ref[...], w2_ref[...], preferred_element_type=jnp.float32)
    o_ref[...] = (o + b2_ref[...]).astype(o_ref.dtype)


def time_embedding_2d(t, params: TimeEmbedding2DParams, *,
                      out_dtype: Optional[jnp.dtype] = None, batch_tile=512):
    """t: (B, 2, t_dim) -> (B, e_dim). `params` from prepare_time_embedding_params."""
    B = t.shape[0]
    x = t.reshape(B, -1)                     # flatten(1) -- glue, plain JAX
    if x.shape[1] != params.in_dim:
        raise ValueError(f"expected flattened dim {params.in_dim}, got {x.shape[1]}")
    out_dtype = jnp.dtype(t.dtype if out_dtype is None else out_dtype)
    out_bytes = out_dtype.itemsize

    in_pad, e_pad, tn = params.in_pad, params.e_pad, params.tn
    budget = _vmem_budget_bytes()

    # ---- Batch tile: as large as VMEM allows (amortize ~0.35us/grid step),
    # multiple of 16 (bf16 sublane pack), and >=2 grid steps when B allows so
    # both v7x TensorCores get work on the "parallel" batch axis.
    b16 = _round_up(B, 16)
    tb = min(batch_tile, b16)
    if b16 >= 32:
        tb = min(tb, _round_up(pl.cdiv(b16, 2), 16))

    fixed_bytes = (2 * in_pad * e_pad * 2 + 2 * e_pad * 4    # w1 + b1 (<=2 bufs)
                   + 2 * e_pad * tn * 2 + 2 * tn * 4)        # w2 + b2 tiles (2 bufs)

    def _vmem_need(tb_):
        return fixed_bytes + (
            2 * tb_ * in_pad * 2        # x tiles (double-buffered, bf16)
            + 2 * tb_ * tn * out_bytes  # output tiles (double-buffered)
            + tb_ * e_pad * 2           # h scratch (bf16)
            + tb_ * e_pad * 4           # in-kernel f32 h before the scratch store
            + tb_ * tn * 4)             # in-kernel f32 accumulator of matmul 2

    while tb > 16 and _vmem_need(tb) > budget:
        tb = max(16, _round_up(tb // 2, 16))
    # TODO(synk): if e_dim is so large that even tb=16 / tn=128 overflows VMEM,
    # add a third grid axis tiling K of the second matmul (accumulate in scratch).

    b_pad = _round_up(B, tb)
    grid = (b_pad // tb, e_pad // tn)

    x_p = jnp.pad(x, ((0, b_pad - B), (0, in_pad - params.in_dim))).astype(jnp.bfloat16)

    vmem_need = _vmem_need(tb)
    cap = _vmem_capacity_bytes()
    # Always set an explicit scoped-VMEM limit (v5e default is only 16 MiB),
    # clamped below the chip's physical capacity (64 MiB per core on v7x).
    vmem_limit = int(min(max(vmem_need + (4 << 20), 32 << 20), cap - (2 << 20)))

    cost = pl.CostEstimate(
        flops=2 * b_pad * e_pad * (in_pad + e_pad),
        transcendentals=b_pad * e_pad,
        bytes_accessed=(x_p.size * 2 + params.w1.size * 2 + params.b1.size * 4
                        + grid[0] * (params.w2.size * 2 + params.b2.size * 4)
                        + b_pad * e_pad * out_bytes),
    )

    def build(single_buffer_weights):
        def resident(shape, index_map):
            # Constant index map -> no point double-buffering; halves weight VMEM.
            if single_buffer_weights:
                return pl.BlockSpec(shape, index_map, pipeline_mode=pl.Buffered(1))
            return pl.BlockSpec(shape, index_map)

        return pl.pallas_call(
            _time_embedding_kernel,
            out_shape=jax.ShapeDtypeStruct((b_pad, e_pad), out_dtype),
            grid=grid,
            in_specs=[
                pl.BlockSpec((tb, in_pad), lambda i, n: (i, 0)),   # x: streamed over batch
                resident((in_pad, e_pad), lambda i, n: (0, 0)),    # w1: VMEM-resident
                resident((1, e_pad), lambda i, n: (0, 0)),         # b1: VMEM-resident
                pl.BlockSpec((e_pad, tn), lambda i, n: (0, n)),    # w2: streamed over N
                pl.BlockSpec((1, tn), lambda i, n: (0, n)),        # b2: streamed over N
            ],
            out_specs=pl.BlockSpec((tb, tn), lambda i, n: (i, n)),
            scratch_shapes=[pltpu.VMEM((tb, e_pad), jnp.bfloat16)],  # cached SiLU(h)
            compiler_params=pltpu.CompilerParams(
                dimension_semantics=("parallel", "arbitrary"),
                vmem_limit_bytes=vmem_limit,
            ),
            cost_estimate=cost,
        )

    args = (x_p, params.w1, params.b1, params.w2, params.b2)
    try:
        out = build(True)(*args)
    except Exception:
        # pipeline_mode=pl.Buffered(1) unsupported on this jax version — fall
        # back to default double-buffering of the (small) resident w1/b1.
        out = build(False)(*args)

    return out[:B, :params.e_dim]


def reference(t, w1, b1, w2, b2):
    x = t.reshape(t.shape[0], -1)
    h = x @ w1 + b1
    h = h * jax.nn.sigmoid(h)
    return h @ w2 + b2


def _make_params(key, t_dim, e_dim):
    k_w1, k_b1, k_w2, k_b2 = jax.random.split(key, 4)
    in_dim = 2 * t_dim
    # PyTorch Linear init ranges; weights stored transposed (in, out).
    w1 = jax.random.uniform(k_w1, (in_dim, e_dim), jnp.float32,
                            -1.0 / jnp.sqrt(in_dim), 1.0 / jnp.sqrt(in_dim))
    b1 = jax.random.uniform(k_b1, (e_dim,), jnp.float32,
                            -1.0 / jnp.sqrt(in_dim), 1.0 / jnp.sqrt(in_dim))
    w2 = jax.random.uniform(k_w2, (e_dim, e_dim), jnp.float32,
                            -1.0 / jnp.sqrt(e_dim), 1.0 / jnp.sqrt(e_dim))
    b2 = jax.random.uniform(k_b2, (e_dim,), jnp.float32,
                            -1.0 / jnp.sqrt(e_dim), 1.0 / jnp.sqrt(e_dim))
    return w1, b1, w2, b2


if __name__ == "__main__":
    key = jax.random.PRNGKey(0)
    k1, k2, k3, k4, k5, k6 = jax.random.split(key, 6)

    # Case 1: aligned shapes, single grid step (B=8, t_dim=16, e_dim=128).
    B, t_dim, e_dim = 8, 16, 128
    t = jax.random.normal(k1, (B, 2, t_dim), dtype=jnp.float32)
    w1, b1, w2, b2 = _make_params(k2, t_dim, e_dim)
    params = prepare_time_embedding_params(w1, b1, w2, b2)
    out = jax.block_until_ready(time_embedding_2d(t, params))
    ref = reference(t, w1, b1, w2, b2)
    assert out.shape == (B, e_dim), out.shape
    # bf16 matmul operands with f32 accumulation -> ~1e-2 relative accuracy.
    assert jnp.allclose(out, ref, atol=5e-2, rtol=5e-2), "mismatch vs reference (case 1)"

    # Case 2: unaligned B / e_dim, multi-step batch grid (B=40, t_dim=9, e_dim=96).
    B, t_dim, e_dim = 40, 9, 96
    t = jax.random.normal(k3, (B, 2, t_dim), dtype=jnp.float32)
    w1, b1, w2, b2 = _make_params(k4, t_dim, e_dim)
    params = prepare_time_embedding_params(w1, b1, w2, b2)
    out = jax.block_until_ready(time_embedding_2d(t, params))
    ref = reference(t, w1, b1, w2, b2)
    assert out.shape == (B, e_dim), out.shape
    assert jnp.allclose(out, ref, atol=5e-2, rtol=5e-2), "mismatch vs reference (case 2)"

    # Case 3: force the output-column (N) tiling of the second matmul
    # (B=24, t_dim=7, e_dim=320, max_n_tile=128 -> 2x3 grid, cached h reused).
    B, t_dim, e_dim = 24, 7, 320
    t = jax.random.normal(k5, (B, 2, t_dim), dtype=jnp.float32)
    w1, b1, w2, b2 = _make_params(k6, t_dim, e_dim)
    params = prepare_time_embedding_params(w1, b1, w2, b2, max_n_tile=128)
    out = jax.block_until_ready(time_embedding_2d(t, params))
    ref = reference(t, w1, b1, w2, b2)
    assert out.shape == (B, e_dim), out.shape
    assert jnp.allclose(out, ref, atol=5e-2, rtol=5e-2), "mismatch vs reference (case 3)"

    print("KERNEL_OK")
</pallas_src>

<mosaic_0001>
module attributes {stable_mosaic.version = 11 : i64} {
  func.func @_time_embedding_kernel(%arg0: i32, %arg1: i32, %arg2: memref<16x32xbf16, #tpu.memory_space<vmem>>, %arg3: memref<32x128xbf16, #tpu.memory_space<vmem>>, %arg4: memref<1x128xf32, #tpu.memory_space<vmem>>, %arg5: memref<128x128xbf16, #tpu.memory_space<vmem>>, %arg6: memref<1x128xf32, #tpu.memory_space<vmem>>, %arg7: memref<16x128xf32, #tpu.memory_space<vmem>>, %arg8: memref<16x128xbf16, #tpu.memory_space<vmem>>) attributes {dimension_semantics = [#tpu.dimension_semantics<parallel>, #tpu.dimension_semantics<arbitrary>], iteration_bounds = array<i64: 1, 1>, scalar_prefetch = 0 : i64, scratch_operands = 1 : i64, tpu.core_type = #tpu.core_type<tc>, window_params = [{transform_indices = @transform_0, window_bounds = array<i64: 16, 32>}, {pipeline_mode = #tpu.pipeline_mode<synchronous>, transform_indices = @transform_1, window_bounds = array<i64: 32, 128>}, {pipeline_mode = #tpu.pipeline_mode<synchronous>, transform_indices = @transform_2, window_bounds = array<i64: 1, 128>}, {transform_indices = @transform_3, window_bounds = array<i64: 128, 128>}, {transform_indices = @transform_4, window_bounds = array<i64: 1, 128>}, {transform_indices = @transform_5, window_bounds = array<i64: 16, 128>}]} {
    %c0_i32 = arith.constant 0 : i32
    %0 = arith.cmpi eq, %arg1, %c0_i32 : i32
    %1 = arith.extui %0 : i1 to i32
    %c0_i32_0 = arith.constant 0 : i32
    %2 = arith.cmpi ne, %1, %c0_i32_0 : i32
    scf.if %2 {
      %c0_8 = arith.constant 0 : index
      %c0_9 = arith.constant 0 : index
      %10 = vector.load %arg2[%c0_8, %c0_9] : memref<16x32xbf16, #tpu.memory_space<vmem>>, vector<16x32xbf16>
      %c0_10 = arith.constant 0 : index
      %c0_11 = arith.constant 0 : index
      %11 = vector.load %arg3[%c0_10, %c0_11] : memref<32x128xbf16, #tpu.memory_space<vmem>>, vector<32x128xbf16>
      %cst_12 = arith.constant dense<0.000000e+00> : vector<16x128xf32>
      %12 = tpu.matmul %10, %11, %cst_12 {dimension_numbers = #tpu.dot_dimension_numbers<[1], [0], [0], [1], [0, 0, 1, 1], [], []>} : vector<16x32xbf16>, vector<32x128xbf16>, vector<16x128xf32> -> vector<16x128xf32>
      %c0_13 = arith.constant 0 : index
      %c0_14 = arith.constant 0 : index
      %13 = vector.load %arg4[%c0_13, %c0_14] : memref<1x128xf32, #tpu.memory_space<vmem>>, vector<1x128xf32>
      %14 = vector.broadcast %13 : vector<1x128xf32> to vector<16x128xf32>
      %15 = arith.addf %12, %14 : vector<16x128xf32>
      %16 = arith.negf %15 : vector<16x128xf32>
      %17 = math.exp %16 : vector<16x128xf32>
      %cst_15 = arith.constant 1.000000e+00 : f32
      %18 = vector.broadcast %cst_15 : f32 to vector<16x128xf32>
      %19 = arith.addf %18, %17 : vector<16x128xf32>
      %20 = arith.divf %18, %19 : vector<16x128xf32>
      %21 = arith.mulf %15, %20 : vector<16x128xf32>
      %22 = arith.truncf %21 : vector<16x128xf32> to vector<16x128xbf16>
      %c0_16 = arith.constant 0 : index
      %c0_17 = arith.constant 0 : index
      %23 = vector.load %arg8[%c0_16, %c0_17] : memref<16x128xbf16, #tpu.memory_space<vmem>>, vector<16x128xbf16>
      tpu.vector_store %arg8[%c0_16, %c0_17], %22 {strides = array<i32>} : memref<16x128xbf16, #tpu.memory_space<vmem>>, vector<16x128xbf16>,
    } else {
    }
    %c0 = arith.constant 0 : index
    %c0_1 = arith.constant 0 : index
    %3 = vector.load %arg8[%c0, %c0_1] : memref<16x128xbf16, #tpu.memory_space<vmem>>, vector<16x128xbf16>
    %c0_2 = arith.constant 0 : index
    %c0_3 = arith.constant 0 : index
    %4 = vector.load %arg5[%c0_2, %c0_3] : memref<128x128xbf16, #tpu.memory_space<vmem>>, vector<128x128xbf16>
    %cst = arith.constant dense<0.000000e+00> : vector<16x128xf32>
    %5 = tpu.matmul %3, %4, %cst {dimension_numbers = #tpu.dot_dimension_numbers<[1], [0], [0], [1], [0, 0, 1, 1], [], []>} : vector<16x128xbf16>, vector<128x128xbf16>, vector<16x128xf32> -> vector<16x128xf32>
    %c0_4 = arith.constant 0 : index
    %c0_5 = arith.constant 0 : index
    %6 = vector.load %arg6[%c0_4, %c0_5] : memref<1x128xf32, #tpu.memory_space<vmem>>, vector<1x128xf32>
    %7 = vector.broadcast %6 : vector<1x128xf32> to vector<16x128xf32>
    %8 = arith.addf %5, %7 : vector<16x128xf32>
    %c0_6 = arith.constant 0 : index
    %c0_7 = arith.constant 0 : index
    %9 = vector.load %arg7[%c0_6, %c0_7] : memref<16x128xf32, #tpu.memory_space<vmem>>, vector<16x128xf32>
    tpu.vector_store %arg7[%c0_6, %c0_7], %8 {strides = array<i32>} : memref<16x128xf32, #tpu.memory_space<vmem>>, vector<16x128xf32>,
    return
  }
  func.func @transform_0(%arg0: i32, %arg1: i32) -> (i32, i32) {
    %c0_i32 = arith.constant 0 : i32
    %c0_i32_0 = arith.constant 0 : i32
    return %arg0, %c0_i32 : i32, i32
  }
  func.func @transform_1(%arg0: i32, %arg1: i32) -> (i32, i32) {
    %c0_i32 = arith.constant 0 : i32
    %c0_i32_0 = arith.constant 0 : i32
    %c0_i32_1 = arith.constant 0 : i32
    return %c0_i32, %c0_i32_0 : i32, i32
  }
  func.func @transform_2(%arg0: i32, %arg1: i32) -> (i32, i32) {
    %c0_i32 = arith.constant 0 : i32
    %c0_i32_0 = arith.constant 0 : i32
    %c0_i32_1 = arith.constant 0 : i32
    return %c0_i32, %c0_i32_0 : i32, i32
  }
  func.func @transform_3(%arg0: i32, %arg1: i32) -> (i32, i32) {
    %c0_i32 = arith.constant 0 : i32
    %c0_i32_0 = arith.constant 0 : i32
    return %c0_i32, %arg1 : i32, i32
  }
  func.func @transform_4(%arg0: i32, %arg1: i32) -> (i32, i32) {
    %c0_i32 = arith.constant 0 : i32
    %c0_i32_0 = arith.constant 0 : i32
    return %c0_i32, %arg1 : i32, i32
  }
  func.func @transform_5(%arg0: i32, %arg1: i32) -> (i32, i32) {
    %c0_i32 = arith.constant 0 : i32
    return %arg0, %arg1 : i32, i32
  }
}

module attributes {stable_mosaic.version = 11 : i64} {
  func.func @_time_embedding_kernel(%arg0: i32, %arg1: i32, %arg2: memref<16x32xbf16, #tpu.memory_space<vmem>>, %arg3: memref<32x128xbf16, #tpu.memory_space<vmem>>, %arg4: memref<1x128xf32, #tpu.memory_space<vmem>>, %arg5: memref<128x128xbf16, #tpu.memory_space<vmem>>, %arg6: memref<1x128xf32, #tpu.memory_space<vmem>>, %arg7: memref<16x128xf32, #tpu.memory_space<vmem>>, %arg8: memref<16x128xbf16, #tpu.memory_space<vmem>>) attributes {dimension_semantics = [#tpu.dimension_semantics<parallel>, #tpu.dimension_semantics<arbitrary>], iteration_bounds = array<i64: 1, 1>, scalar_prefetch = 0 : i64, scratch_operands = 1 : i64, tpu.core_type = #tpu.core_type<tc>, window_params = [{transform_indices = @transform_0, window_bounds = array<i64: 16, 32>}, {pipeline_mode = #tpu.pipeline_mode<synchronous>, transform_indices = @transform_1, window_bounds = array<i64: 32, 128>}, {pipeline_mode = #tpu.pipeline_mode<synchronous>, transform_indices = @transform_2, window_bounds = array<i64: 1, 128>}, {transform_indices = @transform_3, window_bounds = array<i64: 128, 128>}, {transform_indices = @transform_4, window_bounds = array<i64: 1, 128>}, {transform_indices = @transform_5, window_bounds = array<i64: 16, 128>}]} {
    %c0_i32 = arith.constant 0 : i32
    %0 = arith.cmpi eq, %arg1, %c0_i32 : i32
    %1 = arith.extui %0 : i1 to i32
    %c0_i32_0 = arith.constant 0 : i32
    %2 = arith.cmpi ne, %1, %c0_i32_0 : i32
    scf.if %2 {
      %c0_8 = arith.constant 0 : index
      %c0_9 = arith.constant 0 : index
      %10 = vector.load %arg2[%c0_8, %c0_9] : memref<16x32xbf16, #tpu.memory_space<vmem>>, vector<16x32xbf16>
      %c0_10 = arith.constant 0 : index
      %c0_11 = arith.constant 0 : index
      %11 = vector.load %arg3[%c0_10, %c0_11] : memref<32x128xbf16, #tpu.memory_space<vmem>>, vector<32x128xbf16>
      %cst_12 = arith.constant dense<0.000000e+00> : vector<16x128xf32>
      %12 = tpu.matmul %10, %11, %cst_12 {dimension_numbers = #tpu.dot_dimension_numbers<[1], [0], [0], [1], [0, 0, 1, 1], [], []>} : vector<16x32xbf16>, vector<32x128xbf16>, vector<16x128xf32> -> vector<16x128xf32>
      %c0_13 = arith.constant 0 : index
      %c0_14 = arith.constant 0 : index
      %13 = vector.load %arg4[%c0_13, %c0_14] : memref<1x128xf32, #tpu.memory_space<vmem>>, vector<1x128xf32>
      %14 = vector.broadcast %13 : vector<1x128xf32> to vector<16x128xf32>
      %15 = arith.addf %12, %14 : vector<16x128xf32>
      %16 = arith.negf %15 : vector<16x128xf32>
      %17 = math.exp %16 : vector<16x128xf32>
      %cst_15 = arith.constant 1.000000e+00 : f32
      %18 = vector.broadcast %cst_15 : f32 to vector<16x128xf32>
      %19 = arith.addf %18, %17 : vector<16x128xf32>
      %20 = arith.divf %18, %19 : vector<16x128xf32>
      %21 = arith.mulf %15, %20 : vector<16x128xf32>
      %22 = arith.truncf %21 : vector<16x128xf32> to vector<16x128xbf16>
      %c0_16 = arith.constant 0 : index
      %c0_17 = arith.constant 0 : index
      %23 = vector.load %arg8[%c0_16, %c0_17] : memref<16x128xbf16, #tpu.memory_space<vmem>>, vector<16x128xbf16>
      tpu.vector_store %arg8[%c0_16, %c0_17], %22 {strides = array<i32>} : memref<16x128xbf16, #tpu.memory_space<vmem>>, vector<16x128xbf16>,
    } else {
    }
    %c0 = arith.constant 0 : index
    %c0_1 = arith.constant 0 : index
    %3 = vector.load %arg8[%c0, %c0_1] : memref<16x128xbf16, #tpu.memory_space<vmem>>, vector<16x128xbf16>
    %c0_2 = arith.constant 0 : index
    %c0_3 = arith.constant 0 : index
    %4 = vector.load %arg5[%c0_2, %c0_3] : memref<128x128xbf16, #tpu.memory_space<vmem>>, vector<128x128xbf16>
    %cst = arith.constant dense<0.000000e+00> : vector<16x128xf32>
    %5 = tpu.matmul %3, %4, %cst {dimension_numbers = #tpu.dot_dimension_numbers<[1], [0], [0], [1], [0, 0, 1, 1], [], []>} : vector<16x128xbf16>, vector<128x128xbf16>, vector<16x128xf32> -> vector<16x128xf32>
    %c0_4 = arith.constant 0 : index
    %c0_5 = arith.constant 0 : index
    %6 = vector.load %arg6[%c0_4, %c0_5] : memref<1x128xf32, #tpu.memory_space<vmem>>, vector<1x128xf32>
    %7 = vector.broadcast %6 : vector<1x128xf32> to vector<16x128xf32>
    %8 = arith.addf %5, %7 : vector<16x128xf32>
    %c0_6 = arith.constant 0 : index
    %c0_7 = arith.constant 0 : index
    %9 = vector.load %arg7[%c0_6, %c0_7] : memref<16x128xf32, #tpu.memory_space<vmem>>, vector<16x128xf32>
    tpu.vector_store %arg7[%c0_6, %c0_7], %8 {strides = array<i32>} : memref<16x128xf32, #tpu.memory_space<vmem>>, vector<16x128xf32>,
    return
  }
  func.func @transform_0(%arg0: i32, %arg1: i32) -> (i32, i32) {
    %c0_i32 = arith.constant 0 : i32
    %c0_i32_0 = arith.constant 0 : i32
    return %arg0, %c0_i32 : i32, i32
  }
  func.func @transform_1(%arg0: i32, %arg1: i32) -> (i32, i32) {
    %c0_i32 = arith.constant 0 : i32
    %c0_i32_0 = arith.constant 0 : i32
    %c0_i32_1 = arith.constant 0 : i32
    return %c0_i32, %c0_i32_0 : i32, i32
  }
  func.func @transform_2(%arg0: i32, %arg1: i32) -> (i32, i32) {
    %c0_i32 = arith.constant 0 : i32
    %c0_i32_0 = arith.constant 0 : i32
    %c0_i32_1 = arith.constant 0 : i32
    return %c0_i32, %c0_i32_0 : i32, i32
  }
  func.func @transform_3(%arg0: i32, %arg1: i32) -> (i32, i32) {
    %c0_i32 = arith.constant 0 : i32
    %c0_i32_0 = arith.constant 0 : i32
    return %c0_i32, %arg1 : i32, i32
  }
  func.func @transform_4(%arg0: i32, %arg1: i32) -> (i32, i32) {
    %c0_i32 = arith.constant 0 : i32
    %c0_i32_0 = arith.constant 0 : i32
    return %c0_i32, %arg1 : i32, i32
  }
  func.func @transform_5(%arg0: i32, %arg1: i32) -> (i32, i32) {
    %c0_i32 = arith.constant 0 : i32
    return %arg0, %arg1 : i32, i32
  }
}

</mosaic_0001>

<llo_original>
// kernel: tpu_custom_call.1
$region0: #{tpu_custom_call.1}
  #allocation0 [shape = 'u32[]', space=smem, size = 0x4, offset = 0x4, fixed_abs, tag = 'smem constant byte address 0x4 - core index']
  #allocation1 [shape = 'u32[144,128]{1,0:T(1,128)}', space=vmem, size = 0x12000, scoped, tag = 'internal scratch']
  #allocation2 [shape = 'bf16[16,128]{1,0:T(8,128)(2,1)}', space=vmem, size = 0x1000, scoped, tag = 'scratch operand']
  %s0 = inlined_call_operand.hbm [shape: bf16[16,32], index: 0, kind: input, shape index: {}]
  %s1 = inlined_call_operand.hbm [shape: bf16[32,128], index: 1, kind: input, shape index: {}]
  %s2 = inlined_call_operand.vmem [shape: f32[1,128], index: 2, kind: input, shape index: {}]
  %s3 = inlined_call_operand.hbm [shape: bf16[128,128], index: 3, kind: input, shape index: {}]
  %s4 = inlined_call_operand.vmem [shape: f32[1,128], index: 4, kind: input, shape index: {}]
  %s5 = inlined_call_operand.hbm [shape: f32[16,128], index: 5, kind: output, shape index: {}]
  %s6 = sld [smem:[#allocation0]]
  $region46: #{tpu_custom_call.1} parent=0
    _
  %s8 = ssub.s32 1, %s6
  %s9 = scalar_select 0, %s8, %s6
  $region1: #{tpu_custom_call.1} parent=0
    #allocation3 [shape = 'u8[4096]{0}', space=vmem, size = 0x1000, scoped, tag = 'input window, operand 0, single buffered']
    #allocation4 [shape = 's32[1]{0}', space=sflag, size = 0x4, scoped, tag = 'scoped memory for tpu_custom_call.1']
    #allocation5 [shape = 's32[1]{0}', space=sflag, size = 0x4, scoped, tag = 'scoped memory for tpu_custom_call.1']
    #allocation6 [shape = 'u8[8192]{0}', space=vmem, size = 0x2000, scoped, tag = 'input window, operand 1, single buffered']
    #allocation7 [shape = 's32[1]{0}', space=sflag, size = 0x4, scoped, tag = 'scoped memory for tpu_custom_call.1']
    #allocation8 [shape = 'u8[32768]{0}', space=vmem, size = 0x8000, scoped, tag = 'input window, operand 3, single buffered']
    #allocation9 [shape = 'u8[8192]{0}', space=vmem, size = 0x2000, scoped, tag = 'output window, operand 0, single buffered']
    %10 = vsyncpa [#allocation4], 0
    %11 = vsyncpa [#allocation7], 0
    %12 = vsyncpa [#allocation5], 0
    // Predicated region
    $region2: #{tpu_custom_call.1} parent=1 // pred_check
      _
    $region3: #{tpu_custom_call.1} parent=1 // pred_check_branch
      %14 = sbr.rel (0) target = $region5
    $region4: #{tpu_custom_call.1} parent=1 // pred_region
      %s16 = ssub.s32 128, 128
      %17 = vsyncadd [#allocation4], %s16
      %s18 = sshll.u32 [#allocation3], 4
      %s19 = int_to_ptr.vmem [resolvable:$true] %s18
      %24 = dma.hbm_to_vmem [thread:$0]  %s0, 128, %s19, [#allocation4], 64, 64, 4
    $region5: #{tpu_custom_call.1} parent=1 // pred_fallthru
      _
    // Predicated region
    $region6: #{tpu_custom_call.1} parent=1 // pred_check
      _
    $region7: #{tpu_custom_call.1} parent=1 // pred_check_branch
      %26 = sbr.rel (0) target = $region9
    $region8: #{tpu_custom_call.1} parent=1 // pred_region
      %s28 = ssub.s32 256, 256
      %29 = vsyncadd [#allocation7], %s28
      %s30 = sshll.u32 [#allocation6], 4
      %s31 = int_to_ptr.vmem [resolvable:$true] %s30
      %36 = dma.hbm_to_vmem [thread:$0]  %s1, 256, %s31, [#allocation7], 64, 64, 4
    $region9: #{tpu_custom_call.1} parent=1 // pred_fallthru
      _
    // Predicated region
    $region10: #{tpu_custom_call.1} parent=1 // pred_check
      _
    $region11: #{tpu_custom_call.1} parent=1 // pred_check_branch
      %38 = sbr.rel (0) target = $region13
    $region12: #{tpu_custom_call.1} parent=1 // pred_region
      _
    $region13: #{tpu_custom_call.1} parent=1 // pred_fallthru
      _
    // Predicated region
    $region14: #{tpu_custom_call.1} parent=1 // pred_check
      _
    $region15: #{tpu_custom_call.1} parent=1 // pred_check_branch
      %40 = sbr.rel (0) target = $region17
    $region16: #{tpu_custom_call.1} parent=1 // pred_region
      %s42 = ssub.s32 1024, 1024
      %43 = vsyncadd [#allocation7], %s42
      %s44 = sshll.u32 [#allocation8], 4
      %s45 = int_to_ptr.vmem [resolvable:$true] %s44
      %50 = dma.hbm_to_vmem [thread:$0]  %s3, 1024, %s45, [#allocation7], 64, 64, 4
    $region17: #{tpu_custom_call.1} parent=1 // pred_fallthru
      _
    // Predicated region
    $region18: #{tpu_custom_call.1} parent=1 // pred_check
      _
    $region19: #{tpu_custom_call.1} parent=1 // pred_check_branch
      %52 = sbr.rel (0) target = $region21
    $region20: #{tpu_custom_call.1} parent=1 // pred_region
      _
    $region21: #{tpu_custom_call.1} parent=1 // pred_fallthru
      _
    // Predicated region
    $region22: #{tpu_custom_call.1} parent=1 // pred_check
      _
    $region23: #{tpu_custom_call.1} parent=1 // pred_check_branch
      %54 = sbr.rel (0) target = $region25
    $region24: #{tpu_custom_call.1} parent=1 // pred_region
      %55 = dma.done [#allocation4], 128
    $region25: #{tpu_custom_call.1} parent=1 // pred_fallthru
      _
    // Predicated region
    $region26: #{tpu_custom_call.1} parent=1 // pred_check
      _
    $region27: #{tpu_custom_call.1} parent=1 // pred_check_branch
      %57 = sbr.rel (0) target = $region29
    $region28: #{tpu_custom_call.1} parent=1 // pred_region
      %58 = dma.done [#allocation7], 256
    $region29: #{tpu_custom_call.1} parent=1 // pred_fallthru
      _
    // Predicated region
    $region30: #{tpu_custom_call.1} parent=1 // pred_check
      _
    $region31: #{tpu_custom_call.1} parent=1 // pred_check_branch
      %60 = sbr.rel (0) target = $region33
    $region32: #{tpu_custom_call.1} parent=1 // pred_region
      %61 = dma.done [#allocation7], 1024
    $region33: #{tpu_custom_call.1} parent=1 // pred_fallthru
      _
    %p63 = scmp.eq.s32.totalorder 0, 0
    // Predicated region
    $region34: #{tpu_custom_call.1} parent=1 // pred_check
      %p64 = pneg %p63
    $region35: #{tpu_custom_call.1} parent=1 // pred_check_branch
      %66 = sbr.rel (%p64) target = $region37
    $region36: #{tpu_custom_call.1} parent=1 // pred_region
      %v67 = vld [vmem:[#allocation3] sm:$0xf]
      %v68 = vld [vmem:[#allocation3 + $0x4] sm:$0xf]
      %v69 = vld [vmem:[#allocation6] sm:$0xf]
      %v70 = vld [vmem:[#allocation6 + $0x4] sm:$0xf]
      %v71 = vld [vmem:[#allocation6 + $0x8] sm:$0xf]
      %v72 = vld [vmem:[#allocation6 + $0xc] sm:$0xf]
      %v73 = vld [vmem:[%s2] sm:$0x1]
      %v75 = vlaneseq
      %v76 = vshrl.u32 %v75, 7
      %v77 = vsub.s32 0, %v76
      %v78 = vrot.slane %v73, %v77
      %v82 = vunpack.c.l.b16 %v67
      %v83 = vunpack.c.l.b16 %v68
      %v84 = vpack.c.b16 %v83, %v82
      %v89 = vunpack.c.l.b16 %v69
      %v90 = vunpack.c.l.b16 %v70
      %v91 = vunpack.c.l.b16 %v71
      %v92 = vunpack.c.l.b16 %v72
      %v93 = vpack.c.b16 %v90, %v89
      %v94 = vpack.c.b16 %v92, %v91
      %vm97 = vcmask 261120
      %v99 = vsel %vm97, %v84, 0
      %101 = vmatprep.subr.bf16.mxu0 0
      %102 = vmatpush1.bf16.msra.mxu0 0
      %103 = vmatprep.subr.bf16.mxu0 0
      %104 = vmatpush1.bf16.msra.mxu0 0
      %105 = vmatprep.subr.bf16.mxu0 0
      %106 = vmatpush1.bf16.msra.mxu0 0
      %107 = vmatprep.subr.bf16.mxu0 0
      %108 = vmatpush1.bf16.msra.mxu0 0
      %109 = vmatprep.subr.bf16.mxu0 0
      %110 = vmatpush1.bf16.msra.mxu0 0
      %111 = vmatprep.subr.bf16.mxu0 0
      %112 = vmatpush1.bf16.msra.mxu0 0
      %113 = vmatprep.subr.bf16.mxu0 0
      %114 = vmatpush1.bf16.msra.mxu0 %v94
      %115 = vmatprep.subr.bf16.mxu0 0
      %116 = vmatpush1.bf16.msra.mxu0 %v93
      %117 = vmatprep.subr.bf16.mxu0 0
      %118 = vmatpush2.bf16.msra.mxu0 0
      %119 = vmatprep.subr.bf16.mxu0 0
      %120 = vmatpush2.bf16.msra.mxu0 0
      %121 = vmatprep.subr.bf16.mxu0 0
      %122 = vmatpush2.bf16.msra.mxu0 0
      %123 = vmatprep.subr.bf16.mxu0 0
      %124 = vmatpush2.bf16.msra.mxu0 0
      %125 = vmatprep.subr.bf16.mxu0 0
      %126 = vmatpush2.bf16.msra.mxu0 0
      %127 = vmatprep.subr.bf16.mxu0 0
      %128 = vmatpush2.bf16.msra.mxu0 0
      %129 = vmatprep.subr.bf16.mxu0 0
      %130 = vmatpush2.bf16.msra.mxu0 0
      %131 = vmatprep.subr.bf16.mxu0 0
      %132 = vmatpush2.bf16.msra.mxu0 0
      %133 = vmatprep.mubr.bf16.mxu0 0
      %134 = vmatmul.mubr.bf16.gmra.mxu0 %v99
      %v135 = vpop.f32.mrf.mxu0
      %v136 = vadd.f32 %v78, %v135
      %v137 = vpop.f32.mrf.mxu0
      %v138 = vpop.f32.mrf.mxu0
      %v139 = vadd.f32 %v78, %v138
      %v140 = vpop.f32.mrf.mxu0
      %141 = vdwg.mxu0
      %v142 = vxor.u32 %v136, 2147483648
      %v143 = vxor.u32 %v139, 2147483648
      %v144 = vmul.f32 %v142, 1.442695
      %v145 = vpow.pop %v144
      %v146 = vmul.f32 %v143, 1.442695
      %v147 = vpow.pop %v146
      %v148 = vadd.f32 %v145, 1.0
      %v149 = vadd.f32 %v147, 1.0
      %v150 = vrcp.pop %v148
      %v151 = vmul.f32 1.0, %v150
      %v152 = vrcp.pop %v149
      %v153 = vmul.f32 1.0, %v152
      %v154 = vmul.f32 %v136, %v151
      %v155 = vmul.f32 %v139, %v153
      %v156 = vpack.c.bf16 %v155, %v154
      %v158 = vunpack.c.l.b16 %v156
      %v159 = vunpack.c.h.b16 %v156
      %v160 = vpack.c.b16 %v158, %v158
      %v161 = vpack.c.b16 %v159, %v159
      %164 = vst [vmem:[#allocation2] sm:$0xf] %v160
      %165 = vst [vmem:[#allocation2 + $0x4] sm:$0xf] %v161
    $region37: #{tpu_custom_call.1} parent=1 // pred_fallthru
      _
    %v166 = vld [vmem:[#allocation2] sm:$0xf]
    %v167 = vld [vmem:[#allocation2 + $0x4] sm:$0xf]
    %v168 = vld [vmem:[#allocation8] sm:$0xf]
    %v169 = vld [vmem:[#allocation8 + $0x4] sm:$0xf]
    %v170 = vld [vmem:[#allocation8 + $0x8] sm:$0xf]
    %v171 = vld [vmem:[#allocation8 + $0xc] sm:$0xf]
    %v172 = vld [vmem:[#allocation8 + $0x10] sm:$0xf]
    %v173 = vld [vmem:[#allocation8 + $0x14] sm:$0xf]
    %v174 = vld [vmem:[#allocation8 + $0x18] sm:$0xf]
    %v175 = vld [vmem:[#allocation8 + $0x1c] sm:$0xf]
    %v176 = vld [vmem:[#allocation8 + $0x20] sm:$0xf]
    %v177 = vld [vmem:[#allocation8 + $0x24] sm:$0xf]
    %v178 = vld [vmem:[#allocation8 + $0x28] sm:$0xf]
    %v179 = vld [vmem:[#allocation8 + $0x2c] sm:$0xf]
    %v180 = vld [vmem:[#allocation8 + $0x30] sm:$0xf]
    %v181 = vld [vmem:[#allocation8 + $0x34] sm:$0xf]
    %v182 = vld [vmem:[#allocation8 + $0x38] sm:$0xf]
    %v183 = vld [vmem:[#allocation8 + $0x3c] sm:$0xf]
    %v184 = vld [vmem:[%s4] sm:$0x1]
    %v186 = vlaneseq
    %v187 = vshrl.u32 %v186, 7
    %v188 = vsub.s32 0, %v187
    %v189 = vrot.slane %v184, %v188
    %v193 = vunpack.c.l.b16 %v166
    %v194 = vunpack.c.l.b16 %v167
    %v195 = vpack.c.b16 %v194, %v193
    %v213 = vunpack.c.l.b16 %v168
    %v214 = vunpack.c.l.b16 %v169
    %v215 = vunpack.c.l.b16 %v170
    %v216 = vunpack.c.l.b16 %v171
    %v217 = vunpack.c.l.b16 %v172
    %v218 = vunpack.c.l.b16 %v173
    %v219 = vunpack.c.l.b16 %v174
    %v220 = vunpack.c.l.b16 %v175
    %v221 = vunpack.c.l.b16 %v176
    %v222 = vunpack.c.l.b16 %v177
    %v223 = vunpack.c.l.b16 %v178
    %v224 = vunpack.c.l.b16 %v179
    %v225 = vunpack.c.l.b16 %v180
    %v226 = vunpack.c.l.b16 %v181
    %v227 = vunpack.c.l.b16 %v182
    %v228 = vunpack.c.l.b16 %v183
    %v229 = vpack.c.b16 %v214, %v213
    %v230 = vpack.c.b16 %v216, %v215
    %v231 = vpack.c.b16 %v218, %v217
    %v232 = vpack.c.b16 %v220, %v219
    %v233 = vpack.c.b16 %v222, %v221
    %v234 = vpack.c.b16 %v224, %v223
    %v235 = vpack.c.b16 %v226, %v225
    %v236 = vpack.c.b16 %v228, %v227
    %245 = vmatprep.subr.bf16.mxu0 0
    %246 = vmatpush1.bf16.msra.mxu0 %v236
    %247 = vmatprep.subr.bf16.mxu0 0
    %248 = vmatpush1.bf16.msra.mxu0 %v235
    %249 = vmatprep.subr.bf16.mxu0 0
    %250 = vmatpush1.bf16.msra.mxu0 %v234
    %251 = vmatprep.subr.bf16.mxu0 0
    %252 = vmatpush1.bf16.msra.mxu0 %v233
    %253 = vmatprep.subr.bf16.mxu0 0
    %254 = vmatpush1.bf16.msra.mxu0 %v232
    %255 = vmatprep.subr.bf16.mxu0 0
    %256 = vmatpush1.bf16.msra.mxu0 %v231
    %257 = vmatprep.subr.bf16.mxu0 0
    %258 = vmatpush1.bf16.msra.mxu0 %v230
    %259 = vmatprep.subr.bf16.mxu0 0
    %260 = vmatpush1.bf16.msra.mxu0 %v229
    %261 = vmatprep.subr.bf16.mxu0 0
    %262 = vmatpush2.bf16.msra.mxu0 0
    %263 = vmatprep.subr.bf16.mxu0 0
    %264 = vmatpush2.bf16.msra.mxu0 0
    %265 = vmatprep.subr.bf16.mxu0 0
    %266 = vmatpush2.bf16.msra.mxu0 0
    %267 = vmatprep.subr.bf16.mxu0 0
    %268 = vmatpush2.bf16.msra.mxu0 0
    %269 = vmatprep.subr.bf16.mxu0 0
    %270 = vmatpush2.bf16.msra.mxu0 0
    %271 = vmatprep.subr.bf16.mxu0 0
    %272 = vmatpush2.bf16.msra.mxu0 0
    %273 = vmatprep.subr.bf16.mxu0 0
    %274 = vmatpush2.bf16.msra.mxu0 0
    %275 = vmatprep.subr.bf16.mxu0 0
    %276 = vmatpush2.bf16.msra.mxu0 0
    %277 = vmatprep.mubr.bf16.mxu0 0
    %278 = vmatmul.mubr.bf16.gmra.mxu0 %v195
    %v279 = vpop.f32.mrf.mxu0
    %v280 = vadd.f32 %v189, %v279
    %v281 = vpop.f32.mrf.mxu0
    %v282 = vpop.f32.mrf.mxu0
    %v283 = vadd.f32 %v189, %v282
    %v284 = vpop.f32.mrf.mxu0
    %285 = vdwg.mxu0
    %286 = vst [vmem:[#allocation9] sm:$0xff] %v280
    %287 = vst [vmem:[#allocation9 + $0x8] sm:$0xff] %v283
    // Predicated region
    $region38: #{tpu_custom_call.1} parent=1 // pred_check
      _
    $region39: #{tpu_custom_call.1} parent=1 // pred_check_branch
      %289 = sbr.rel (0) target = $region41
    $region40: #{tpu_custom_call.1} parent=1 // pred_region
      %s291 = ssub.s32 256, 256
      %292 = vsyncadd [#allocation5], %s291
      %s293 = sshll.u32 [#allocation9], 4
      %s294 = int_to_ptr.vmem [resolvable:$true] %s293
      %299 = dma.vmem_to_hbm [thread:$0]  %s294, 256, %s5, [#allocation5], 128, 128, 8
    $region41: #{tpu_custom_call.1} parent=1 // pred_fallthru
      _
    // Predicated region
    $region42: #{tpu_custom_call.1} parent=1 // pred_check
      _
    $region43: #{tpu_custom_call.1} parent=1 // pred_check_branch
      %301 = sbr.rel (0) target = $region45
    $region44: #{tpu_custom_call.1} parent=1 // pred_region
      %302 = dma.done [#allocation5], 256
    $region45: #{tpu_custom_call.1} parent=1 // pred_fallthru
      _
    %303 = vsyncpa [#allocation4], 1
    %304 = vsyncpa [#allocation7], 1
    %305 = vsyncpa [#allocation5], 1

// kernel: tpu_custom_call.1
$region0: #{tpu_custom_call.1}
  #allocation0 [shape = 'u32[]', space=smem, size = 0x4, offset = 0x4, fixed_abs, tag = 'smem constant byte address 0x4 - core index']
  #allocation1 [shape = 'u32[144,128]{1,0:T(1,128)}', space=vmem, size = 0x12000, scoped, tag = 'internal scratch']
  #allocation2 [shape = 'bf16[16,128]{1,0:T(8,128)(2,1)}', space=vmem, size = 0x1000, scoped, tag = 'scratch operand']
  %s0 = inlined_call_operand.hbm [shape: bf16[16,32], index: 0, kind: input, shape index: {}]
  %s1 = inlined_call_operand.hbm [shape: bf16[32,128], index: 1, kind: input, shape index: {}]
  %s2 = inlined_call_operand.vmem [shape: f32[1,128], index: 2, kind: input, shape index: {}]
  %s3 = inlined_call_operand.hbm [shape: bf16[128,128], index: 3, kind: input, shape index: {}]
  %s4 = inlined_call_operand.vmem [shape: f32[1,128], index: 4, kind: input, shape index: {}]
  %s5 = inlined_call_operand.hbm [shape: f32[16,128], index: 5, kind: output, shape index: {}]
  %s6 = sld [smem:[#allocation0]]
  $region46: #{tpu_custom_call.1} parent=0
    _
  %s8 = ssub.s32 1, %s6
  %s9 = scalar_select 0, %s8, %s6
  $region1: #{tpu_custom_call.1} parent=0
    #allocation3 [shape = 'u8[4096]{0}', space=vmem, size = 0x1000, scoped, tag = 'input window, operand 0, single buffered']
    #allocation4 [shape = 's32[1]{0}', space=sflag, size = 0x4, scoped, tag = 'scoped memory for tpu_custom_call.1']
    #allocation5 [shape = 's32[1]{0}', space=sflag, size = 0x4, scoped, tag = 'scoped memory for tpu_custom_call.1']
    #allocation6 [shape = 'u8[8192]{0}', space=vmem, size = 0x2000, scoped, tag = 'input window, operand 1, single buffered']
    #allocation7 [shape = 's32[1]{0}', space=sflag, size = 0x4, scoped, tag = 'scoped memory for tpu_custom_call.1']
    #allocation8 [shape = 'u8[32768]{0}', space=vmem, size = 0x8000, scoped, tag = 'input window, operand 3, single buffered']
    #allocation9 [shape = 'u8[8192]{0}', space=vmem, size = 0x2000, scoped, tag = 'output window, operand 0, single buffered']
    %10 = vsyncpa [#allocation4], 0
    %11 = vsyncpa [#allocation7], 0
    %12 = vsyncpa [#allocation5], 0
    // Predicated region
    $region2: #{tpu_custom_call.1} parent=1 // pred_check
      _
    $region3: #{tpu_custom_call.1} parent=1 // pred_check_branch
      %14 = sbr.rel (0) target = $region5
    $region4: #{tpu_custom_call.1} parent=1 // pred_region
      %s16 = ssub.s32 128, 128
      %17 = vsyncadd [#allocation4], %s16
      %s18 = sshll.u32 [#allocation3], 4
      %s19 = int_to_ptr.vmem [resolvable:$true] %s18
      %24 = dma.hbm_to_vmem [thread:$0]  %s0, 128, %s19, [#allocation4], 64, 64, 4
    $region5: #{tpu_custom_call.1} parent=1 // pred_fallthru
      _
    // Predicated region
    $region6: #{tpu_custom_call.1} parent=1 // pred_check
      _
    $region7: #{tpu_custom_call.1} parent=1 // pred_check_branch
      %26 = sbr.rel (0) target = $region9
    $region8: #{tpu_custom_call.1} parent=1 // pred_region
      %s28 = ssub.s32 256, 256
      %29 = vsyncadd [#allocation7], %s28
      %s30 = sshll.u32 [#allocation6], 4
      %s31 = int_to_ptr.vmem [resolvable:$true] %s30
      %36 = dma.hbm_to_vmem [thread:$0]  %s1, 256, %s31, [#allocation7], 64, 64, 4
    $region9: #{tpu_custom_call.1} parent=1 // pred_fallthru
      _
    // Predicated region
    $region10: #{tpu_custom_call.1} parent=1 // pred_check
      _
    $region11: #{tpu_custom_call.1} parent=1 // pred_check_branch
      %38 = sbr.rel (0) target = $region13
    $region12: #{tpu_custom_call.1} parent=1 // pred_region
      _
    $region13: #{tpu_custom_call.1} parent=1 // pred_fallthru
      _
    // Predicated region
    $region14: #{tpu_custom_call.1} parent=1 // pred_check
      _
    $region15: #{tpu_custom_call.1} parent=1 // pred_check_branch
      %40 = sbr.rel (0) target = $region17
    $region16: #{tpu_custom_call.1} parent=1 // pred_region
      %s42 = ssub.s32 1024, 1024
      %43 = vsyncadd [#allocation7], %s42
      %s44 = sshll.u32 [#allocation8], 4
      %s45 = int_to_ptr.vmem [resolvable:$true] %s44
      %50 = dma.hbm_to_vmem [thread:$0]  %s3, 1024, %s45, [#allocation7], 64, 64, 4
    $region17: #{tpu_custom_call.1} parent=1 // pred_fallthru
      _
    // Predicated region
    $region18: #{tpu_custom_call.1} parent=1 // pred_check
      _
    $region19: #{tpu_custom_call.1} parent=1 // pred_check_branch
      %52 = sbr.rel (0) target = $region21
    $region20: #{tpu_custom_call.1} parent=1 // pred_region
      _
    $region21: #{tpu_custom_call.1} parent=1 // pred_fallthru
      _
    // Predicated region
    $region22: #{tpu_custom_call.1} parent=1 // pred_check
      _
    $region23: #{tpu_custom_call.1} parent=1 // pred_check_branch
      %54 = sbr.rel (0) target = $region25
    $region24: #{tpu_custom_call.1} parent=1 // pred_region
      %55 = dma.done [#allocation4], 128
    $region25: #{tpu_custom_call.1} parent=1 // pred_fallthru
      _
    // Predicated region
    $region26: #{tpu_custom_call.1} parent=1 // pred_check
      _
    $region27: #{tpu_custom_call.1} parent=1 // pred_check_branch
      %57 = sbr.rel (0) target = $region29
    $region28: #{tpu_custom_call.1} parent=1 // pred_region
      %58 = dma.done [#allocation7], 256
    $region29: #{tpu_custom_call.1} parent=1 // pred_fallthru
      _
    // Predicated region
    $region30: #{tpu_custom_call.1} parent=1 // pred_check
      _
    $region31: #{tpu_custom_call.1} parent=1 // pred_check_branch
      %60 = sbr.rel (0) target = $region33
    $region32: #{tpu_custom_call.1} parent=1 // pred_region
      %61 = dma.done [#allocation7], 1024
    $region33: #{tpu_custom_call.1} parent=1 // pred_fallthru
      _
    %p63 = scmp.eq.s32.totalorder 0, 0
    // Predicated region
    $region34: #{tpu_custom_call.1} parent=1 // pred_check
      %p64 = pneg %p63
    $region35: #{tpu_custom_call.1} parent=1 // pred_check_branch
      %66 = sbr.rel (%p64) target = $region37
    $region36: #{tpu_custom_call.1} parent=1 // pred_region
      %v67 = vld [vmem:[#allocation3] sm:$0xf]
      %v68 = vld [vmem:[#allocation3 + $0x4] sm:$0xf]
      %v69 = vld [vmem:[#allocation6] sm:$0xf]
      %v70 = vld [vmem:[#allocation6 + $0x4] sm:$0xf]
      %v71 = vld [vmem:[#allocation6 + $0x8] sm:$0xf]
      %v72 = vld [vmem:[#allocation6 + $0xc] sm:$0xf]
      %v73 = vld [vmem:[%s2] sm:$0x1]
      %v75 = vlaneseq
      %v76 = vshrl.u32 %v75, 7
      %v77 = vsub.s32 0, %v76
      %v78 = vrot.slane %v73, %v77
      %v82 = vunpack.c.l.b16 %v67
      %v83 = vunpack.c.l.b16 %v68
      %v84 = vpack.c.b16 %v83, %v82
      %v89 = vunpack.c.l.b16 %v69
      %v90 = vunpack.c.l.b16 %v70
      %v91 = vunpack.c.l.b16 %v71
      %v92 = vunpack.c.l.b16 %v72
      %v93 = vpack.c.b16 %v90, %v89
      %v94 = vpack.c.b16 %v92, %v91
      %vm97 = vcmask 261120
      %v99 = vsel %vm97, %v84, 0
      %101 = vmatprep.subr.bf16.mxu0 0
      %102 = vmatpush1.bf16.msra.mxu0 0
      %103 = vmatprep.subr.bf16.mxu0 0
      %104 = vmatpush1.bf16.msra.mxu0 0
      %105 = vmatprep.subr.bf16.mxu0 0
      %106 = vmatpush1.bf16.msra.mxu0 0
      %107 = vmatprep.subr.bf16.mxu0 0
      %108 = vmatpush1.bf16.msra.mxu0 0
      %109 = vmatprep.subr.bf16.mxu0 0
      %110 = vmatpush1.bf16.msra.mxu0 0
      %111 = vmatprep.subr.bf16.mxu0 0
      %112 = vmatpush1.bf16.msra.mxu0 0
      %113 = vmatprep.subr.bf16.mxu0 0
      %114 = vmatpush1.bf16.msra.mxu0 %v94
      %115 = vmatprep.subr.bf16.mxu0 0
      %116 = vmatpush1.bf16.msra.mxu0 %v93
      %117 = vmatprep.subr.bf16.mxu0 0
      %118 = vmatpush2.bf16.msra.mxu0 0
      %119 = vmatprep.subr.bf16.mxu0 0
      %120 = vmatpush2.bf16.msra.mxu0 0
      %121 = vmatprep.subr.bf16.mxu0 0
      %122 = vmatpush2.bf16.msra.mxu0 0
      %123 = vmatprep.subr.bf16.mxu0 0
      %124 = vmatpush2.bf16.msra.mxu0 0
      %125 = vmatprep.subr.bf16.mxu0 0
      %126 = vmatpush2.bf16.msra.mxu0 0
      %127 = vmatprep.subr.bf16.mxu0 0
      %128 = vmatpush2.bf16.msra.mxu0 0
      %129 = vmatprep.subr.bf16.mxu0 0
      %130 = vmatpush2.bf16.msra.mxu0 0
      %131 = vmatprep.subr.bf16.mxu0 0
      %132 = vmatpush2.bf16.msra.mxu0 0
      %133 = vmatprep.mubr.bf16.mxu0 0
      %134 = vmatmul.mubr.bf16.gmra.mxu0 %v99
      %v135 = vpop.f32.mrf.mxu0
      %v136 = vadd.f32 %v78, %v135
      %v137 = vpop.f32.mrf.mxu0
      %v138 = vpop.f32.mrf.mxu0
      %v139 = vadd.f32 %v78, %v138
      %v140 = vpop.f32.mrf.mxu0
      %141 = vdwg.mxu0
      %v142 = vxor.u32 %v136, 2147483648
      %v143 = vxor.u32 %v139, 2147483648
      %v144 = vmul.f32 %v142, 1.442695
      %v145 = vpow.pop %v144
      %v146 = vmul.f32 %v143, 1.442695
      %v147 = vpow.pop %v146
      %v148 = vadd.f32 %v145, 1.0
      %v149 = vadd.f32 %v147, 1.0
      %v150 = vrcp.pop %v148
      %v151 = vmul.f32 1.0, %v150
      %v152 = vrcp.pop %v149
      %v153 = vmul.f32 1.0, %v152
      %v154 = vmul.f32 %v136, %v151
      %v155 = vmul.f32 %v139, %v153
      %v156 = vpack.c.bf16 %v155, %v154
      %v158 = vunpack.c.l.b16 %v156
      %v159 = vunpack.c.h.b16 %v156
      %v160 = vpack.c.b16 %v158, %v158
      %v161 = vpack.c.b16 %v159, %v159
      %164 = vst [vmem:[#allocation2] sm:$0xf] %v160
      %165 = vst [vmem:[#allocation2 + $0x4] sm:$0xf] %v161
    $region37: #{tpu_custom_call.1} parent=1 // pred_fallthru
      _
    %v166 = vld [vmem:[#allocation2] sm:$0xf]
    %v167 = vld [vmem:[#allocation2 + $0x4] sm:$0xf]
    %v168 = vld [vmem:[#allocation8] sm:$0xf]
    %v169 = vld [vmem:[#allocation8 + $0x4] sm:$0xf]
    %v170 = vld [vmem:[#allocation8 + $0x8] sm:$0xf]
    %v171 = vld [vmem:[#allocation8 + $0xc] sm:$0xf]
    %v172 = vld [vmem:[#allocation8 + $0x10] sm:$0xf]
    %v173 = vld [vmem:[#allocation8 + $0x14] sm:$0xf]
    %v174 = vld [vmem:[#allocation8 + $0x18] sm:$0xf]
    %v175 = vld [vmem:[#allocation8 + $0x1c] sm:$0xf]
    %v176 = vld [vmem:[#allocation8 + $0x20] sm:$0xf]
    %v177 = vld [vmem:[#allocation8 + $0x24] sm:$0xf]
    %v178 = vld [vmem:[#allocation8 + $0x28] sm:$0xf]
    %v179 = vld [vmem:[#allocation8 + $0x2c] sm:$0xf]
    %v180 = vld [vmem:[#allocation8 + $0x30] sm:$0xf]
    %v181 = vld [vmem:[#allocation8 + $0x34] sm:$0xf]
    %v182 = vld [vmem:[#allocation8 + $0x38] sm:$0xf]
    %v183 = vld [vmem:[#allocation8 + $0x3c] sm:$0xf]
    %v184 = vld [vmem:[%s4] sm:$0x1]
    %v186 = vlaneseq
    %v187 = vshrl.u32 %v186, 7
    %v188 = vsub.s32 0, %v187
    %v189 = vrot.slane %v184, %v188
    %v193 = vunpack.c.l.b16 %v166
    %v194 = vunpack.c.l.b16 %v167
    %v195 = vpack.c.b16 %v194, %v193
    %v213 = vunpack.c.l.b16 %v168
    %v214 = vunpack.c.l.b16 %v169
    %v215 = vunpack.c.l.b16 %v170
    %v216 = vunpack.c.l.b16 %v171
    %v217 = vunpack.c.l.b16 %v172
    %v218 = vunpack.c.l.b16 %v173
    %v219 = vunpack.c.l.b16 %v174
    %v220 = vunpack.c.l.b16 %v175
    %v221 = vunpack.c.l.b16 %v176
    %v222 = vunpack.c.l.b16 %v177
    %v223 = vunpack.c.l.b16 %v178
    %v224 = vunpack.c.l.b16 %v179
    %v225 = vunpack.c.l.b16 %v180
    %v226 = vunpack.c.l.b16 %v181
    %v227 = vunpack.c.l.b16 %v182
    %v228 = vunpack.c.l.b16 %v183
    %v229 = vpack.c.b16 %v214, %v213
    %v230 = vpack.c.b16 %v216, %v215
    %v231 = vpack.c.b16 %v218, %v217
    %v232 = vpack.c.b16 %v220, %v219
    %v233 = vpack.c.b16 %v222, %v221
    %v234 = vpack.c.b16 %v224, %v223
    %v235 = vpack.c.b16 %v226, %v225
    %v236 = vpack.c.b16 %v228, %v227
    %245 = vmatprep.subr.bf16.mxu0 0
    %246 = vmatpush1.bf16.msra.mxu0 %v236
    %247 = vmatprep.subr.bf16.mxu0 0
    %248 = vmatpush1.bf16.msra.mxu0 %v235
    %249 = vmatprep.subr.bf16.mxu0 0
    %250 = vmatpush1.bf16.msra.mxu0 %v234
    %251 = vmatprep.subr.bf16.mxu0 0
    %252 = vmatpush1.bf16.msra.mxu0 %v233
    %253 = vmatprep.subr.bf16.mxu0 0
    %254 = vmatpush1.bf16.msra.mxu0 %v232
    %255 = vmatprep.subr.bf16.mxu0 0
    %256 = vmatpush1.bf16.msra.mxu0 %v231
    %257 = vmatprep.subr.bf16.mxu0 0
    %258 = vmatpush1.bf16.msra.mxu0 %v230
    %259 = vmatprep.subr.bf16.mxu0 0
    %260 = vmatpush1.bf16.msra.mxu0 %v229
    %261 = vmatprep.subr.bf16.mxu0 0
    %262 = vmatpush2.bf16.msra.mxu0 0
    %263 = vmatprep.subr.bf16.mxu0 0
    %264 = vmatpush2.bf16.msra.mxu0 0
    %265 = vmatprep.subr.bf16.mxu0 0
    %266 = vmatpush2.bf16.msra.mxu0 0
    %267 = vmatprep.subr.bf16.mxu0 0
    %268 = vmatpush2.bf16.msra.mxu0 0
    %269 = vmatprep.subr.bf16.mxu0 0
    %270 = vmatpush2.bf16.msra.mxu0 0
    %271 = vmatprep.subr.bf16.mxu0 0
    %272 = vmatpush2.bf16.msra.mxu0 0
    %273 = vmatprep.subr.bf16.mxu0 0
    %274 = vmatpush2.bf16.msra.mxu0 0
    %275 = vmatprep.subr.bf16.mxu0 0
    %276 = vmatpush2.bf16.msra.mxu0 0
    %277 = vmatprep.mubr.bf16.mxu0 0
    %278 = vmatmul.mubr.bf16.gmra.mxu0 %v195
    %v279 = vpop.f32.mrf.mxu0
    %v280 = vadd.f32 %v189, %v279
    %v281 = vpop.f32.mrf.mxu0
    %v282 = vpop.f32.mrf.mxu0
    %v283 = vadd.f32 %v189, %v282
    %v284 = vpop.f32.mrf.mxu0
    %285 = vdwg.mxu0
    %286 = vst [vmem:[#allocation9] sm:$0xff] %v280
    %287 = vst [vmem:[#allocation9 + $0x8] sm:$0xff] %v283
    // Predicated region
    $region38: #{tpu_custom_call.1} parent=1 // pred_check
      _
    $region39: #{tpu_custom_call.1} parent=1 // pred_check_branch
      %289 = sbr.rel (0) target = $region41
    $region40: #{tpu_custom_call.1} parent=1 // pred_region
      %s291 = ssub.s32 256, 256
      %292 = vsyncadd [#allocation5], %s291
      %s293 = sshll.u32 [#allocation9], 4
      %s294 = int_to_ptr.vmem [resolvable:$true] %s293
      %299 = dma.vmem_to_hbm [thread:$0]  %s294, 256, %s5, [#allocation5], 128, 128, 8
    $region41: #{tpu_custom_call.1} parent=1 // pred_fallthru
      _
    // Predicated region
    $region42: #{tpu_custom_call.1} parent=1 // pred_check
      _
    $region43: #{tpu_custom_call.1} parent=1 // pred_check_branch
      %301 = sbr.rel (0) target = $region45
    $region44: #{tpu_custom_call.1} parent=1 // pred_region
      %302 = dma.done [#allocation5], 256
    $region45: #{tpu_custom_call.1} parent=1 // pred_fallthru
      _
    %303 = vsyncpa [#allocation4], 1
    %304 = vsyncpa [#allocation7], 1
    %305 = vsyncpa [#allocation5], 1

</llo_original>
